<compile_context>
chip_gen: v5e
topology: v5e:2x2
jax: 0.10.0
libtpu: 0.0.40
codegen_flags: <defaults>
</compile_context>

<pallas_src>
import functools
import math

import jax
import jax.numpy as jnp
from jax.experimental import pallas as pl
from jax.experimental.pallas import tpu as pltpu

DIM = 4
PARAM_STRIDE = DIM * (DIM + 1) // 2 + DIM  # 14
LANES = 128
GROUP_SUB = 16                        # sublanes per in-kernel group (f32 & bf16 tile aligned)
GROUP_ELEMS = GROUP_SUB * LANES       # 2048 batch elements per group
MIN_TILE = GROUP_ELEMS
LOG_NORM_CONST = -0.5 * DIM * math.log(2.0 * math.pi)  # hoisted out of the kernel


def _round_up(x, m):
    return (x + m - 1) // m * m


def _mg_loss_kernel(mvn_ref, lat_ref, bbox_ref, out_ref, *,
                    lat_num, batch, groups_per_tile, has_padding):
    """One grid step = one batch tile of groups_per_tile * 2048 elements.

    mvn_ref : (groups_per_tile, K*14, 16, 128)   group-major, batch on (sublane, lane)
    lat_ref : (groups_per_tile, K,    16, 128)
    bbox_ref: (groups_per_tile, 4,    16, 128)
    out_ref : (1, 16, 128)   per-tile partial sum of log(sum_i N_i * w_i) (without const)
    """
    t = pl.program_id(0)
    tile_elem_base = t * (groups_per_tile * GROUP_ELEMS)

    # In-group (sublane, lane) -> flat offset; computed once per tile (hoisted iota).
    row = jax.lax.broadcasted_iota(jnp.int32, (GROUP_SUB, LANES), 0)
    lane = jax.lax.broadcasted_iota(jnp.int32, (GROUP_SUB, LANES), 1)
    rl = row * LANES + lane

    def group_body(g, acc):
        bbox = bbox_ref[g].astype(jnp.float32)          # (4, 16, 128)
        x0, x1, x2, x3 = bbox[0], bbox[1], bbox[2], bbox[3]

        mix = jnp.zeros((GROUP_SUB, LANES), jnp.float32)
        # K is tiny & static -> Python-unrolled component loop.
        for i in range(lat_num):
            fb = i * PARAM_STRIDE
            # Residual r = x - mu.
            r0 = x0 - mvn_ref[g, fb + 0].astype(jnp.float32)
            r1 = x1 - mvn_ref[g, fb + 1].astype(jnp.float32)
            r2 = x2 - mvn_ref[g, fb + 2].astype(jnp.float32)
            r3 = x3 - mvn_ref[g, fb + 3].astype(jnp.float32)
            # Packed row-major upper triangle U: row0 -> 4..7, row1 -> 8..10,
            # row2 -> 11..12, row3 -> 13 (matches the torch cov_chunk fill loop).
            c00 = mvn_ref[g, fb + 4].astype(jnp.float32)
            c01 = mvn_ref[g, fb + 5].astype(jnp.float32)
            c02 = mvn_ref[g, fb + 6].astype(jnp.float32)
            c03 = mvn_ref[g, fb + 7].astype(jnp.float32)
            c11 = mvn_ref[g, fb + 8].astype(jnp.float32)
            c12 = mvn_ref[g, fb + 9].astype(jnp.float32)
            c13 = mvn_ref[g, fb + 10].astype(jnp.float32)
            c22 = mvn_ref[g, fb + 11].astype(jnp.float32)
            c23 = mvn_ref[g, fb + 12].astype(jnp.float32)
            c33 = mvn_ref[g, fb + 13].astype(jnp.float32)

            z0 = c00 * r0 + c01 * r1 + c02 * r2 + c03 * r3
            z1 = c11 * r1 + c12 * r2 + c13 * r3
            z2 = c22 * r2 + c23 * r3
            z3 = c33 * r3
            quad = z0 * z0 + z1 * z1 + z2 * z2 + z3 * z3
            # exp(logdet - 0.5*quad) == |prod diag| * exp(-0.5*quad): one EUP op, not two.
            absdet = jnp.abs(c00 * c11 * c22 * c33)
            lat_i = lat_ref[g, i].astype(jnp.float32)
            # TODO(synk): no log-sum-exp stabilization (same as the PyTorch reference).
            mix = mix + jnp.exp(-0.5 * quad) * absdet * lat_i

        if has_padding:
            # Padded elements (zero-padded params -> mix == 0) must contribute log(1) = 0.
            valid = rl < (batch - (tile_elem_base + g * GROUP_ELEMS))
            mix = jnp.where(valid, mix, 1.0)
        return acc + jnp.log(mix)

    acc0 = jnp.zeros((GROUP_SUB, LANES), jnp.float32)
    acc = jax.lax.fori_loop(0, groups_per_tile, group_body, acc0,
                            unroll=min(2, groups_per_tile))
    out_ref[0] = acc


def mg_loss(mvn_param, lat_var, bbox_input, *, b_tile=32768,
            param_dtype=jnp.bfloat16, vmem_input_budget=10 * 1024 * 1024):
    B, K = lat_var.shape
    assert mvn_param.shape == (B, K * PARAM_STRIDE)
    assert bbox_input.shape == (B, DIM)

    # ---- K-aware tile sizing: big tiles, bounded double-buffered VMEM, >= 2 tiles. ----
    p_item = jnp.dtype(param_dtype).itemsize
    bytes_per_elem = 2 * (K * PARAM_STRIDE * p_item + (K + DIM) * 4)  # double-buffered ins
    cap = max(MIN_TILE, (vmem_input_budget // bytes_per_elem) // MIN_TILE * MIN_TILE)

    total = _round_up(B, MIN_TILE)
    b_tile = max(MIN_TILE, _round_up(b_tile, MIN_TILE))
    b_tile = min(b_tile, cap, total)
    if total >= 2 * MIN_TILE:             # keep at least 2 tiles (v7x: 2 TensorCores)
        b_tile = min(b_tile, _round_up(total // 2, MIN_TILE))

    B_pad = _round_up(B, b_tile)
    num_tiles = B_pad // b_tile
    gpt = b_tile // GROUP_ELEMS           # groups per tile
    G_total = B_pad // GROUP_ELEMS

    # Group-major layout: [B, F] -> [G, F, 16, 128]  (batch idx = g*2048 + sub*128 + lane).
    # Cast + pad + transpose fuse into a single XLA copy of the inputs.
    def to_group_major(x, dtype):
        F = x.shape[1]
        xp = x.astype(dtype)
        if B_pad != B:
            xp = jnp.pad(xp, ((0, B_pad - B), (0, 0)))
        return xp.reshape(G_total, GROUP_SUB, LANES, F).transpose(0, 3, 1, 2)

    mvn_t = to_group_major(mvn_param, param_dtype)     # big tensor: bf16 by default
    lat_t = to_group_major(lat_var, jnp.float32)       # tiny: keep f32
    bbox_t = to_group_major(bbox_input, jnp.float32)   # tiny: keep f32

    cost = pl.CostEstimate(
        flops=int(40 * K * B_pad + 2 * B_pad),
        transcendentals=int((K + 1) * B_pad),
        bytes_accessed=int(mvn_t.size * p_item + (lat_t.size + bbox_t.size) * 4
                           + num_tiles * GROUP_SUB * LANES * 4),
    )

    kernel = functools.partial(_mg_loss_kernel, lat_num=K, batch=B,
                               groups_per_tile=gpt, has_padding=(B_pad != B))
    partials = pl.pallas_call(
        kernel,
        out_shape=jax.ShapeDtypeStruct((num_tiles, GROUP_SUB, LANES), jnp.float32),
        grid=(num_tiles,),
        in_specs=[
            pl.BlockSpec((gpt, K * PARAM_STRIDE, GROUP_SUB, LANES), lambda i: (i, 0, 0, 0)),
            pl.BlockSpec((gpt, K, GROUP_SUB, LANES), lambda i: (i, 0, 0, 0)),
            pl.BlockSpec((gpt, DIM, GROUP_SUB, LANES), lambda i: (i, 0, 0, 0)),
        ],
        out_specs=pl.BlockSpec((1, GROUP_SUB, LANES), lambda i: (i, 0, 0)),
        compiler_params=pltpu.CompilerParams(dimension_semantics=("parallel",)),
        cost_estimate=cost,
    )(mvn_t, lat_t, bbox_t)

    # Tiny final reduce in the wrapper; -(dim/2)*log(2*pi) added once per *valid* element.
    return -(jnp.sum(partials) + B * LOG_NORM_CONST) / B


def mg_loss_ref(mvn_param, lat_var, bbox_input):
    """Plain-JAX reference (same semantics) for validation."""
    B, K = lat_var.shape
    const = -0.5 * DIM * math.log(2.0 * math.pi)
    logps = []
    for i in range(K):
        base = i * PARAM_STRIDE
        miu = mvn_param[:, base:base + DIM]
        cov = mvn_param[:, base + DIM:base + PARAM_STRIDE]
        U = jnp.zeros((B, DIM, DIM), jnp.float32)
        cnt = 0
        for j in range(DIM):
            U = U.at[:, j, j:].set(cov[:, cnt:cnt + DIM - j])
            cnt += DIM - j
        r = bbox_input - miu
        z = jnp.einsum("bjk,bk->bj", U, r)
        quad = jnp.sum(z * z, axis=-1)
        logdet = jnp.sum(jnp.log(jnp.abs(jnp.diagonal(U, axis1=1, axis2=2))), axis=-1)
        logps.append(const + logdet - 0.5 * quad)
    logp = jnp.stack(logps, axis=1)  # (B, K)
    return -jnp.sum(jnp.log(jnp.sum(jnp.exp(logp) * lat_var, axis=1))) / B


def _make_inputs(key, B, K):
    k1, k2, k3, k4 = jax.random.split(key, 4)
    mvn_param = 0.5 * jax.random.normal(k1, (B, K * PARAM_STRIDE), jnp.float32)
    # Keep diagonal entries of each packed upper-triangle away from zero.
    diag_idx = []
    for i in range(K):
        base = i * PARAM_STRIDE + DIM
        diag_idx += [base + 0, base + 4, base + 7, base + 9]
    diag_idx = jnp.array(diag_idx)
    mvn_param = mvn_param.at[:, diag_idx].set(
        1.0 + 0.1 * jnp.abs(jax.random.normal(k2, (B, len(diag_idx)), jnp.float32)))
    lat_var = jax.nn.softmax(jax.random.normal(k4, (B, K), jnp.float32), axis=-1)
    bbox_input = jax.random.normal(k3, (B, DIM), jnp.float32)
    return mvn_param, lat_var, bbox_input


if __name__ == "__main__":
    key = jax.random.PRNGKey(0)

    # Small case (single tile, heavy padding path), default bf16 param storage.
    mvn_param, lat_var, bbox_input = _make_inputs(key, B=8, K=3)
    loss = jax.block_until_ready(mg_loss(mvn_param, lat_var, bbox_input))
    ref = jax.block_until_ready(mg_loss_ref(mvn_param, lat_var, bbox_input))
    assert jnp.allclose(loss, ref, rtol=5e-2, atol=5e-2), (loss, ref)

    # Multi-tile case (grid, pipelining, remainder masking), f32 storage -> tight tolerance.
    mvn2, lat2, bbox2 = _make_inputs(jax.random.PRNGKey(1), B=5000, K=3)
    loss32 = jax.block_until_ready(mg_loss(mvn2, lat2, bbox2, param_dtype=jnp.float32))
    ref2 = jax.block_until_ready(mg_loss_ref(mvn2, lat2, bbox2))
    assert jnp.allclose(loss32, ref2, rtol=1e-4, atol=1e-5), (loss32, ref2)

    # Same multi-tile case with the default bf16 storage (bandwidth-optimized path).
    loss16 = jax.block_until_ready(mg_loss(mvn2, lat2, bbox2))
    assert jnp.allclose(loss16, ref2, rtol=5e-2, atol=5e-2), (loss16, ref2)

    print("KERNEL_OK")
</pallas_src>

<mosaic_0001>
module attributes {stable_mosaic.version = 11 : i64} {
  func.func @_mg_loss_kernel(%arg0: i32, %arg1: memref<1x42x16x128xbf16, #tpu.memory_space<vmem>>, %arg2: memref<1x3x16x128xf32, #tpu.memory_space<vmem>>, %arg3: memref<1x4x16x128xf32, #tpu.memory_space<vmem>>, %arg4: memref<1x16x128xf32, #tpu.memory_space<vmem>>) attributes {dimension_semantics = [#tpu.dimension_semantics<parallel>], iteration_bounds = array<i64: 1>, scalar_prefetch = 0 : i64, scratch_operands = 0 : i64, tpu.core_type = #tpu.core_type<tc>, window_params = [{transform_indices = @transform_0, window_bounds = array<i64: 1, 42, 16, 128>}, {transform_indices = @transform_1, window_bounds = array<i64: 1, 3, 16, 128>}, {transform_indices = @transform_2, window_bounds = array<i64: 1, 4, 16, 128>}, {transform_indices = @transform_3, window_bounds = array<i64: 1, 16, 128>}]} {
    %c2048_i32 = arith.constant 2048 : i32
    %0 = arith.muli %arg0, %c2048_i32 : i32
    %1 = tpu.iota {dimensions = array<i32: 0>} : vector<16x128xi32>
    %2 = tpu.iota {dimensions = array<i32: 1>} : vector<16x128xi32>
    %c128_i32 = arith.constant 128 : i32
    %3 = vector.broadcast %c128_i32 : i32 to vector<16x128xi32>
    %4 = arith.muli %1, %3 : vector<16x128xi32>
    %5 = arith.addi %4, %2 : vector<16x128xi32>
    %cst = arith.constant 0.000000e+00 : f32
    %6 = vector.broadcast %cst : f32 to vector<16x128xf32>
    %c0_i32 = arith.constant 0 : i32
    %7 = arith.index_cast %c0_i32 : i32 to index
    %c0 = arith.constant 0 : index
    %c0_0 = arith.constant 0 : index
    %c0_1 = arith.constant 0 : index
    %8 = vector.load %arg3[%7, %c0, %c0_0, %c0_1] : memref<1x4x16x128xf32, #tpu.memory_space<vmem>>, vector<1x4x16x128xf32>
    %9 = vector.shape_cast %8 : vector<1x4x16x128xf32> to vector<4x16x128xf32>
    %10 = vector.extract_strided_slice %9 {offsets = [0, 0, 0], sizes = [1, 16, 128], strides = [1, 1, 1]} : vector<4x16x128xf32> to vector<1x16x128xf32>
    %11 = vector.shape_cast %10 : vector<1x16x128xf32> to vector<16x128xf32>
    %12 = vector.extract_strided_slice %9 {offsets = [1, 0, 0], sizes = [1, 16, 128], strides = [1, 1, 1]} : vector<4x16x128xf32> to vector<1x16x128xf32>
    %13 = vector.shape_cast %12 : vector<1x16x128xf32> to vector<16x128xf32>
    %14 = vector.extract_strided_slice %9 {offsets = [2, 0, 0], sizes = [1, 16, 128], strides = [1, 1, 1]} : vector<4x16x128xf32> to vector<1x16x128xf32>
    %15 = vector.shape_cast %14 : vector<1x16x128xf32> to vector<16x128xf32>
    %16 = vector.extract_strided_slice %9 {offsets = [3, 0, 0], sizes = [1, 16, 128], strides = [1, 1, 1]} : vector<4x16x128xf32> to vector<1x16x128xf32>
    %17 = vector.shape_cast %16 : vector<1x16x128xf32> to vector<16x128xf32>
    %cst_2 = arith.constant 0.000000e+00 : f32
    %18 = vector.broadcast %cst_2 : f32 to vector<16x128xf32>
    %19 = arith.index_cast %c0_i32 : i32 to index
    %c0_3 = arith.constant 0 : index
    %c0_4 = arith.constant 0 : index
    %c0_5 = arith.constant 0 : index
    %20 = vector.load %arg1[%19, %c0_3, %c0_4, %c0_5] : memref<1x42x16x128xbf16, #tpu.memory_space<vmem>>, vector<1x1x16x128xbf16>
    %21 = vector.shape_cast %20 : vector<1x1x16x128xbf16> to vector<16x128xbf16>
    %22 = arith.extf %21 : vector<16x128xbf16> to vector<16x128xf32>
    %23 = arith.subf %11, %22 : vector<16x128xf32>
    %24 = arith.index_cast %c0_i32 : i32 to index
    %c1 = arith.constant 1 : index
    %c0_6 = arith.constant 0 : index
    %c0_7 = arith.constant 0 : index
    %25 = vector.load %arg1[%24, %c1, %c0_6, %c0_7] : memref<1x42x16x128xbf16, #tpu.memory_space<vmem>>, vector<1x1x16x128xbf16>
    %26 = vector.shape_cast %25 : vector<1x1x16x128xbf16> to vector<16x128xbf16>
    %27 = arith.extf %26 : vector<16x128xbf16> to vector<16x128xf32>
    %28 = arith.subf %13, %27 : vector<16x128xf32>
    %29 = arith.index_cast %c0_i32 : i32 to index
    %c2 = arith.constant 2 : index
    %c0_8 = arith.constant 0 : index
    %c0_9 = arith.constant 0 : index
    %30 = vector.load %arg1[%29, %c2, %c0_8, %c0_9] : memref<1x42x16x128xbf16, #tpu.memory_space<vmem>>, vector<1x1x16x128xbf16>
    %31 = vector.shape_cast %30 : vector<1x1x16x128xbf16> to vector<16x128xbf16>
    %32 = arith.extf %31 : vector<16x128xbf16> to vector<16x128xf32>
    %33 = arith.subf %15, %32 : vector<16x128xf32>
    %34 = arith.index_cast %c0_i32 : i32 to index
    %c3 = arith.constant 3 : index
    %c0_10 = arith.constant 0 : index
    %c0_11 = arith.constant 0 : index
    %35 = vector.load %arg1[%34, %c3, %c0_10, %c0_11] : memref<1x42x16x128xbf16, #tpu.memory_space<vmem>>, vector<1x1x16x128xbf16>
    %36 = vector.shape_cast %35 : vector<1x1x16x128xbf16> to vector<16x128xbf16>
    %37 = arith.extf %36 : vector<16x128xbf16> to vector<16x128xf32>
    %38 = arith.subf %17, %37 : vector<16x128xf32>
    %39 = arith.index_cast %c0_i32 : i32 to index
    %c4 = arith.constant 4 : index
    %c0_12 = arith.constant 0 : index
    %c0_13 = arith.constant 0 : index
    %40 = vector.load %arg1[%39, %c4, %c0_12, %c0_13] : memref<1x42x16x128xbf16, #tpu.memory_space<vmem>>, vector<1x1x16x128xbf16>
    %41 = vector.shape_cast %40 : vector<1x1x16x128xbf16> to vector<16x128xbf16>
    %42 = arith.extf %41 : vector<16x128xbf16> to vector<16x128xf32>
    %43 = arith.index_cast %c0_i32 : i32 to index
    %c5 = arith.constant 5 : index
    %c0_14 = arith.constant 0 : index
    %c0_15 = arith.constant 0 : index
    %44 = vector.load %arg1[%43, %c5, %c0_14, %c0_15] : memref<1x42x16x128xbf16, #tpu.memory_space<vmem>>, vector<1x1x16x128xbf16>
    %45 = vector.shape_cast %44 : vector<1x1x16x128xbf16> to vector<16x128xbf16>
    %46 = arith.extf %45 : vector<16x128xbf16> to vector<16x128xf32>
    %47 = arith.index_cast %c0_i32 : i32 to index
    %c6 = arith.constant 6 : index
    %c0_16 = arith.constant 0 : index
    %c0_17 = arith.constant 0 : index
    %48 = vector.load %arg1[%47, %c6, %c0_16, %c0_17] : memref<1x42x16x128xbf16, #tpu.memory_space<vmem>>, vector<1x1x16x128xbf16>
    %49 = vector.shape_cast %48 : vector<1x1x16x128xbf16> to vector<16x128xbf16>
    %50 = arith.extf %49 : vector<16x128xbf16> to vector<16x128xf32>
    %51 = arith.index_cast %c0_i32 : i32 to index
    %c7 = arith.constant 7 : index
    %c0_18 = arith.constant 0 : index
    %c0_19 = arith.constant 0 : index
    %52 = vector.load %arg1[%51, %c7, %c0_18, %c0_19] : memref<1x42x16x128xbf16, #tpu.memory_space<vmem>>, vector<1x1x16x128xbf16>
    %53 = vector.shape_cast %52 : vector<1x1x16x128xbf16> to vector<16x128xbf16>
    %54 = arith.extf %53 : vector<16x128xbf16> to vector<16x128xf32>
    %55 = arith.index_cast %c0_i32 : i32 to index
    %c8 = arith.constant 8 : index
    %c0_20 = arith.constant 0 : index
    %c0_21 = arith.constant 0 : index
    %56 = vector.load %arg1[%55, %c8, %c0_20, %c0_21] : memref<1x42x16x128xbf16, #tpu.memory_space<vmem>>, vector<1x1x16x128xbf16>
    %57 = vector.shape_cast %56 : vector<1x1x16x128xbf16> to vector<16x128xbf16>
    %58 = arith.extf %57 : vector<16x128xbf16> to vector<16x128xf32>
    %59 = arith.index_cast %c0_i32 : i32 to index
    %c9 = arith.constant 9 : index
    %c0_22 = arith.constant 0 : index
    %c0_23 = arith.constant 0 : index
    %60 = vector.load %arg1[%59, %c9, %c0_22, %c0_23] : memref<1x42x16x128xbf16, #tpu.memory_space<vmem>>, vector<1x1x16x128xbf16>
    %61 = vector.shape_cast %60 : vector<1x1x16x128xbf16> to vector<16x128xbf16>
    %62 = arith.extf %61 : vector<16x128xbf16> to vector<16x128xf32>
    %63 = arith.index_cast %c0_i32 : i32 to index
    %c10 = arith.constant 10 : index
    %c0_24 = arith.constant 0 : index
    %c0_25 = arith.constant 0 : index
    %64 = vector.load %arg1[%63, %c10, %c0_24, %c0_25] : memref<1x42x16x128xbf16, #tpu.memory_space<vmem>>, vector<1x1x16x128xbf16>
    %65 = vector.shape_cast %64 : vector<1x1x16x128xbf16> to vector<16x128xbf16>
    %66 = arith.extf %65 : vector<16x128xbf16> to vector<16x128xf32>
    %67 = arith.index_cast %c0_i32 : i32 to index
    %c11 = arith.constant 11 : index
    %c0_26 = arith.constant 0 : index
    %c0_27 = arith.constant 0 : index
    %68 = vector.load %arg1[%67, %c11, %c0_26, %c0_27] : memref<1x42x16x128xbf16, #tpu.memory_space<vmem>>, vector<1x1x16x128xbf16>
    %69 = vector.shape_cast %68 : vector<1x1x16x128xbf16> to vector<16x128xbf16>
    %70 = arith.extf %69 : vector<16x128xbf16> to vector<16x128xf32>
    %71 = arith.index_cast %c0_i32 : i32 to index
    %c12 = arith.constant 12 : index
    %c0_28 = arith.constant 0 : index
    %c0_29 = arith.constant 0 : index
    %72 = vector.load %arg1[%71, %c12, %c0_28, %c0_29] : memref<1x42x16x128xbf16, #tpu.memory_space<vmem>>, vector<1x1x16x128xbf16>
    %73 = vector.shape_cast %72 : vector<1x1x16x128xbf16> to vector<16x128xbf16>
    %74 = arith.extf %73 : vector<16x128xbf16> to vector<16x128xf32>
    %75 = arith.index_cast %c0_i32 : i32 to index
    %c13 = arith.constant 13 : index
    %c0_30 = arith.constant 0 : index
    %c0_31 = arith.constant 0 : index
    %76 = vector.load %arg1[%75, %c13, %c0_30, %c0_31] : memref<1x42x16x128xbf16, #tpu.memory_space<vmem>>, vector<1x1x16x128xbf16>
    %77 = vector.shape_cast %76 : vector<1x1x16x128xbf16> to vector<16x128xbf16>
    %78 = arith.extf %77 : vector<16x128xbf16> to vector<16x128xf32>
    %79 = arith.mulf %42, %23 : vector<16x128xf32>
    %80 = arith.mulf %46, %28 : vector<16x128xf32>
    %81 = arith.addf %79, %80 : vector<16x128xf32>
    %82 = arith.mulf %50, %33 : vector<16x128xf32>
    %83 = arith.addf %81, %82 : vector<16x128xf32>
    %84 = arith.mulf %54, %38 : vector<16x128xf32>
    %85 = arith.addf %83, %84 : vector<16x128xf32>
    %86 = arith.mulf %58, %28 : vector<16x128xf32>
    %87 = arith.mulf %62, %33 : vector<16x128xf32>
    %88 = arith.addf %86, %87 : vector<16x128xf32>
    %89 = arith.mulf %66, %38 : vector<16x128xf32>
    %90 = arith.addf %88, %89 : vector<16x128xf32>
    %91 = arith.mulf %70, %33 : vector<16x128xf32>
    %92 = arith.mulf %74, %38 : vector<16x128xf32>
    %93 = arith.addf %91, %92 : vector<16x128xf32>
    %94 = arith.mulf %78, %38 : vector<16x128xf32>
    %95 = arith.mulf %85, %85 : vector<16x128xf32>
    %96 = arith.mulf %90, %90 : vector<16x128xf32>
    %97 = arith.addf %95, %96 : vector<16x128xf32>
    %98 = arith.mulf %93, %93 : vector<16x128xf32>
    %99 = arith.addf %97, %98 : vector<16x128xf32>
    %100 = arith.mulf %94, %94 : vector<16x128xf32>
    %101 = arith.addf %99, %100 : vector<16x128xf32>
    %102 = arith.mulf %42, %58 : vector<16x128xf32>
    %103 = arith.mulf %102, %70 : vector<16x128xf32>
    %104 = arith.mulf %103, %78 : vector<16x128xf32>
    %105 = math.absf %104 : vector<16x128xf32>
    %106 = arith.index_cast %c0_i32 : i32 to index
    %c0_32 = arith.constant 0 : index
    %c0_33 = arith.constant 0 : index
    %c0_34 = arith.constant 0 : index
    %107 = vector.load %arg2[%106, %c0_32, %c0_33, %c0_34] : memref<1x3x16x128xf32, #tpu.memory_space<vmem>>, vector<1x1x16x128xf32>
    %108 = vector.shape_cast %107 : vector<1x1x16x128xf32> to vector<16x128xf32>
    %cst_35 = arith.constant -5.000000e-01 : f32
    %109 = vector.broadcast %cst_35 : f32 to vector<16x128xf32>
    %110 = arith.mulf %109, %101 : vector<16x128xf32>
    %111 = math.exp %110 : vector<16x128xf32>
    %112 = arith.mulf %111, %105 : vector<16x128xf32>
    %113 = arith.mulf %112, %108 : vector<16x128xf32>
    %114 = arith.addf %18, %113 : vector<16x128xf32>
    %115 = arith.index_cast %c0_i32 : i32 to index
    %c14 = arith.constant 14 : index
    %c0_36 = arith.constant 0 : index
    %c0_37 = arith.constant 0 : index
    %116 = vector.load %arg1[%115, %c14, %c0_36, %c0_37] : memref<1x42x16x128xbf16, #tpu.memory_space<vmem>>, vector<1x1x16x128xbf16>
    %117 = vector.shape_cast %116 : vector<1x1x16x128xbf16> to vector<16x128xbf16>
    %118 = arith.extf %117 : vector<16x128xbf16> to vector<16x128xf32>
    %119 = arith.subf %11, %118 : vector<16x128xf32>
    %120 = arith.index_cast %c0_i32 : i32 to index
    %c15 = arith.constant 15 : index
    %c0_38 = arith.constant 0 : index
    %c0_39 = arith.constant 0 : index
    %121 = vector.load %arg1[%120, %c15, %c0_38, %c0_39] : memref<1x42x16x128xbf16, #tpu.memory_space<vmem>>, vector<1x1x16x128xbf16>
    %122 = vector.shape_cast %121 : vector<1x1x16x128xbf16> to vector<16x128xbf16>
    %123 = arith.extf %122 : vector<16x128xbf16> to vector<16x128xf32>
    %124 = arith.subf %13, %123 : vector<16x128xf32>
    %125 = arith.index_cast %c0_i32 : i32 to index
    %c16 = arith.constant 16 : index
    %c0_40 = arith.constant 0 : index
    %c0_41 = arith.constant 0 : index
    %126 = vector.load %arg1[%125, %c16, %c0_40, %c0_41] : memref<1x42x16x128xbf16, #tpu.memory_space<vmem>>, vector<1x1x16x128xbf16>
    %127 = vector.shape_cast %126 : vector<1x1x16x128xbf16> to vector<16x128xbf16>
    %128 = arith.extf %127 : vector<16x128xbf16> to vector<16x128xf32>
    %129 = arith.subf %15, %128 : vector<16x128xf32>
    %130 = arith.index_cast %c0_i32 : i32 to index
    %c17 = arith.constant 17 : index
    %c0_42 = arith.constant 0 : index
    %c0_43 = arith.constant 0 : index
    %131 = vector.load %arg1[%130, %c17, %c0_42, %c0_43] : memref<1x42x16x128xbf16, #tpu.memory_space<vmem>>, vector<1x1x16x128xbf16>
    %132 = vector.shape_cast %131 : vector<1x1x16x128xbf16> to vector<16x128xbf16>
    %133 = arith.extf %132 : vector<16x128xbf16> to vector<16x128xf32>
    %134 = arith.subf %17, %133 : vector<16x128xf32>
    %135 = arith.index_cast %c0_i32 : i32 to index
    %c18 = arith.constant 18 : index
    %c0_44 = arith.constant 0 : index
    %c0_45 = arith.constant 0 : index
    %136 = vector.load %arg1[%135, %c18, %c0_44, %c0_45] : memref<1x42x16x128xbf16, #tpu.memory_space<vmem>>, vector<1x1x16x128xbf16>
    %137 = vector.shape_cast %136 : vector<1x1x16x128xbf16> to vector<16x128xbf16>
    %138 = arith.extf %137 : vector<16x128xbf16> to vector<16x128xf32>
    %139 = arith.index_cast %c0_i32 : i32 to index
    %c19 = arith.constant 19 : index
    %c0_46 = arith.constant 0 : index
    %c0_47 = arith.constant 0 : index
    %140 = vector.load %arg1[%139, %c19, %c0_46, %c0_47] : memref<1x42x16x128xbf16, #tpu.memory_space<vmem>>, vector<1x1x16x128xbf16>
    %141 = vector.shape_cast %140 : vector<1x1x16x128xbf16> to vector<16x128xbf16>
    %142 = arith.extf %141 : vector<16x128xbf16> to vector<16x128xf32>
    %143 = arith.index_cast %c0_i32 : i32 to index
    %c20 = arith.constant 20 : index
    %c0_48 = arith.constant 0 : index
    %c0_49 = arith.constant 0 : index
    %144 = vector.load %arg1[%143, %c20, %c0_48, %c0_49] : memref<1x42x16x128xbf16, #tpu.memory_space<vmem>>, vector<1x1x16x128xbf16>
    %145 = vector.shape_cast %144 : vector<1x1x16x128xbf16> to vector<16x128xbf16>
    %146 = arith.extf %145 : vector<16x128xbf16> to vector<16x128xf32>
    %147 = arith.index_cast %c0_i32 : i32 to index
    %c21 = arith.constant 21 : index
    %c0_50 = arith.constant 0 : index
    %c0_51 = arith.constant 0 : index
    %148 = vector.load %arg1[%147, %c21, %c0_50, %c0_51] : memref<1x42x16x128xbf16, #tpu.memory_space<vmem>>, vector<1x1x16x128xbf16>
    %149 = vector.shape_cast %148 : vector<1x1x16x128xbf16> to vector<16x128xbf16>
    %150 = arith.extf %149 : vector<16x128xbf16> to vector<16x128xf32>
    %151 = arith.index_cast %c0_i32 : i32 to index
    %c22 = arith.constant 22 : index
    %c0_52 = arith.constant 0 : index
    %c0_53 = arith.constant 0 : index
    %152 = vector.load %arg1[%151, %c22, %c0_52, %c0_53] : memref<1x42x16x128xbf16, #tpu.memory_space<vmem>>, vector<1x1x16x128xbf16>
    %153 = vector.shape_cast %152 : vector<1x1x16x128xbf16> to vector<16x128xbf16>
    %154 = arith.extf %153 : vector<16x128xbf16> to vector<16x128xf32>
    %155 = arith.index_cast %c0_i32 : i32 to index
    %c23 = arith.constant 23 : index
    %c0_54 = arith.constant 0 : index
    %c0_55 = arith.constant 0 : index
    %156 = vector.load %arg1[%155, %c23, %c0_54, %c0_55] : memref<1x42x16x128xbf16, #tpu.memory_space<vmem>>, vector<1x1x16x128xbf16>
    %157 = vector.shape_cast %156 : vector<1x1x16x128xbf16> to vector<16x128xbf16>
    %158 = arith.extf %157 : vector<16x128xbf16> to vector<16x128xf32>
    %159 = arith.index_cast %c0_i32 : i32 to index
    %c24 = arith.constant 24 : index
    %c0_56 = arith.constant 0 : index
    %c0_57 = arith.constant 0 : index
    %160 = vector.load %arg1[%159, %c24, %c0_56, %c0_57] : memref<1x42x16x128xbf16, #tpu.memory_space<vmem>>, vector<1x1x16x128xbf16>
    %161 = vector.shape_cast %160 : vector<1x1x16x128xbf16> to vector<16x128xbf16>
    %162 = arith.extf %161 : vector<16x128xbf16> to vector<16x128xf32>
    %163 = arith.index_cast %c0_i32 : i32 to index
    %c25 = arith.constant 25 : index
    %c0_58 = arith.constant 0 : index
    %c0_59 = arith.constant 0 : index
    %164 = vector.load %arg1[%163, %c25, %c0_58, %c0_59] : memref<1x42x16x128xbf16, #tpu.memory_space<vmem>>, vector<1x1x16x128xbf16>
    %165 = vector.shape_cast %164 : vector<1x1x16x128xbf16> to vector<16x128xbf16>
    %166 = arith.extf %165 : vector<16x128xbf16> to vector<16x128xf32>
    %167 = arith.index_cast %c0_i32 : i32 to index
    %c26 = arith.constant 26 : index
    %c0_60 = arith.constant 0 : index
    %c0_61 = arith.constant 0 : index
    %168 = vector.load %arg1[%167, %c26, %c0_60, %c0_61] : memref<1x42x16x128xbf16, #tpu.memory_space<vmem>>, vector<1x1x16x128xbf16>
    %169 = vector.shape_cast %168 : vector<1x1x16x128xbf16> to vector<16x128xbf16>
    %170 = arith.extf %169 : vector<16x128xbf16> to vector<16x128xf32>
    %171 = arith.index_cast %c0_i32 : i32 to index
    %c27 = arith.constant 27 : index
    %c0_62 = arith.constant 0 : index
    %c0_63 = arith.constant 0 : index
    %172 = vector.load %arg1[%171, %c27, %c0_62, %c0_63] : memref<1x42x16x128xbf16, #tpu.memory_space<vmem>>, vector<1x1x16x128xbf16>
    %173 = vector.shape_cast %172 : vector<1x1x16x128xbf16> to vector<16x128xbf16>
    %174 = arith.extf %173 : vector<16x128xbf16> to vector<16x128xf32>
    %175 = arith.mulf %138, %119 : vector<16x128xf32>
    %176 = arith.mulf %142, %124 : vector<16x128xf32>
    %177 = arith.addf %175, %176 : vector<16x128xf32>
    %178 = arith.mulf %146, %129 : vector<16x128xf32>
    %179 = arith.addf %177, %178 : vector<16x128xf32>
    %180 = arith.mulf %150, %134 : vector<16x128xf32>
    %181 = arith.addf %179, %180 : vector<16x128xf32>
    %182 = arith.mulf %154, %124 : vector<16x128xf32>
    %183 = arith.mulf %158, %129 : vector<16x128xf32>
    %184 = arith.addf %182, %183 : vector<16x128xf32>
    %185 = arith.mulf %162, %134 : vector<16x128xf32>
    %186 = arith.addf %184, %185 : vector<16x128xf32>
    %187 = arith.mulf %166, %129 : vector<16x128xf32>
    %188 = arith.mulf %170, %134 : vector<16x128xf32>
    %189 = arith.addf %187, %188 : vector<16x128xf32>
    %190 = arith.mulf %174, %134 : vector<16x128xf32>
    %191 = arith.mulf %181, %181 : vector<16x128xf32>
    %192 = arith.mulf %186, %186 : vector<16x128xf32>
    %193 = arith.addf %191, %192 : vector<16x128xf32>
    %194 = arith.mulf %189, %189 : vector<16x128xf32>
    %195 = arith.addf %193, %194 : vector<16x128xf32>
    %196 = arith.mulf %190, %190 : vector<16x128xf32>
    %197 = arith.addf %195, %196 : vector<16x128xf32>
    %198 = arith.mulf %138, %154 : vector<16x128xf32>
    %199 = arith.mulf %198, %166 : vector<16x128xf32>
    %200 = arith.mulf %199, %174 : vector<16x128xf32>
    %201 = math.absf %200 : vector<16x128xf32>
    %202 = arith.index_cast %c0_i32 : i32 to index
    %c1_64 = arith.constant 1 : index
    %c0_65 = arith.constant 0 : index
    %c0_66 = arith.constant 0 : index
    %203 = vector.load %arg2[%202, %c1_64, %c0_65, %c0_66] : memref<1x3x16x128xf32, #tpu.memory_space<vmem>>, vector<1x1x16x128xf32>
    %204 = vector.shape_cast %203 : vector<1x1x16x128xf32> to vector<16x128xf32>
    %cst_67 = arith.constant -5.000000e-01 : f32
    %205 = vector.broadcast %cst_67 : f32 to vector<16x128xf32>
    %206 = arith.mulf %205, %197 : vector<16x128xf32>
    %207 = math.exp %206 : vector<16x128xf32>
    %208 = arith.mulf %207, %201 : vector<16x128xf32>
    %209 = arith.mulf %208, %204 : vector<16x128xf32>
    %210 = arith.addf %114, %209 : vector<16x128xf32>
    %211 = arith.index_cast %c0_i32 : i32 to index
    %c28 = arith.constant 28 : index
    %c0_68 = arith.constant 0 : index
    %c0_69 = arith.constant 0 : index
    %212 = vector.load %arg1[%211, %c28, %c0_68, %c0_69] : memref<1x42x16x128xbf16, #tpu.memory_space<vmem>>, vector<1x1x16x128xbf16>
    %213 = vector.shape_cast %212 : vector<1x1x16x128xbf16> to vector<16x128xbf16>
    %214 = arith.extf %213 : vector<16x128xbf16> to vector<16x128xf32>
    %215 = arith.subf %11, %214 : vector<16x128xf32>
    %216 = arith.index_cast %c0_i32 : i32 to index
    %c29 = arith.constant 29 : index
    %c0_70 = arith.constant 0 : index
    %c0_71 = arith.constant 0 : index
    %217 = vector.load %arg1[%216, %c29, %c0_70, %c0_71] : memref<1x42x16x128xbf16, #tpu.memory_space<vmem>>, vector<1x1x16x128xbf16>
    %218 = vector.shape_cast %217 : vector<1x1x16x128xbf16> to vector<16x128xbf16>
    %219 = arith.extf %218 : vector<16x128xbf16> to vector<16x128xf32>
    %220 = arith.subf %13, %219 : vector<16x128xf32>
    %221 = arith.index_cast %c0_i32 : i32 to index
    %c30 = arith.constant 30 : index
    %c0_72 = arith.constant 0 : index
    %c0_73 = arith.constant 0 : index
    %222 = vector.load %arg1[%221, %c30, %c0_72, %c0_73] : memref<1x42x16x128xbf16, #tpu.memory_space<vmem>>, vector<1x1x16x128xbf16>
    %223 = vector.shape_cast %222 : vector<1x1x16x128xbf16> to vector<16x128xbf16>
    %224 = arith.extf %223 : vector<16x128xbf16> to vector<16x128xf32>
    %225 = arith.subf %15, %224 : vector<16x128xf32>
    %226 = arith.index_cast %c0_i32 : i32 to index
    %c31 = arith.constant 31 : index
    %c0_74 = arith.constant 0 : index
    %c0_75 = arith.constant 0 : index
    %227 = vector.load %arg1[%226, %c31, %c0_74, %c0_75] : memref<1x42x16x128xbf16, #tpu.memory_space<vmem>>, vector<1x1x16x128xbf16>
    %228 = vector.shape_cast %227 : vector<1x1x16x128xbf16> to vector<16x128xbf16>
    %229 = arith.extf %228 : vector<16x128xbf16> to vector<16x128xf32>
    %230 = arith.subf %17, %229 : vector<16x128xf32>
    %231 = arith.index_cast %c0_i32 : i32 to index
    %c32 = arith.constant 32 : index
    %c0_76 = arith.constant 0 : index
    %c0_77 = arith.constant 0 : index
    %232 = vector.load %arg1[%231, %c32, %c0_76, %c0_77] : memref<1x42x16x128xbf16, #tpu.memory_space<vmem>>, vector<1x1x16x128xbf16>
    %233 = vector.shape_cast %232 : vector<1x1x16x128xbf16> to vector<16x128xbf16>
    %234 = arith.extf %233 : vector<16x128xbf16> to vector<16x128xf32>
    %235 = arith.index_cast %c0_i32 : i32 to index
    %c33 = arith.constant 33 : index
    %c0_78 = arith.constant 0 : index
    %c0_79 = arith.constant 0 : index
    %236 = vector.load %arg1[%235, %c33, %c0_78, %c0_79] : memref<1x42x16x128xbf16, #tpu.memory_space<vmem>>, vector<1x1x16x128xbf16>
    %237 = vector.shape_cast %236 : vector<1x1x16x128xbf16> to vector<16x128xbf16>
    %238 = arith.extf %237 : vector<16x128xbf16> to vector<16x128xf32>
    %239 = arith.index_cast %c0_i32 : i32 to index
    %c34 = arith.constant 34 : index
    %c0_80 = arith.constant 0 : index
    %c0_81 = arith.constant 0 : index
    %240 = vector.load %arg1[%239, %c34, %c0_80, %c0_81] : memref<1x42x16x128xbf16, #tpu.memory_space<vmem>>, vector<1x1x16x128xbf16>
    %241 = vector.shape_cast %240 : vector<1x1x16x128xbf16> to vector<16x128xbf16>
    %242 = arith.extf %241 : vector<16x128xbf16> to vector<16x128xf32>
    %243 = arith.index_cast %c0_i32 : i32 to index
    %c35 = arith.constant 35 : index
    %c0_82 = arith.constant 0 : index
    %c0_83 = arith.constant 0 : index
    %244 = vector.load %arg1[%243, %c35, %c0_82, %c0_83] : memref<1x42x16x128xbf16, #tpu.memory_space<vmem>>, vector<1x1x16x128xbf16>
    %245 = vector.shape_cast %244 : vector<1x1x16x128xbf16> to vector<16x128xbf16>
    %246 = arith.extf %245 : vector<16x128xbf16> to vector<16x128xf32>
    %247 = arith.index_cast %c0_i32 : i32 to index
    %c36 = arith.constant 36 : index
    %c0_84 = arith.constant 0 : index
    %c0_85 = arith.constant 0 : index
    %248 = vector.load %arg1[%247, %c36, %c0_84, %c0_85] : memref<1x42x16x128xbf16, #tpu.memory_space<vmem>>, vector<1x1x16x128xbf16>
    %249 = vector.shape_cast %248 : vector<1x1x16x128xbf16> to vector<16x128xbf16>
    %250 = arith.extf %249 : vector<16x128xbf16> to vector<16x128xf32>
    %251 = arith.index_cast %c0_i32 : i32 to index
    %c37 = arith.constant 37 : index
    %c0_86 = arith.constant 0 : index
    %c0_87 = arith.constant 0 : index
    %252 = vector.load %arg1[%251, %c37, %c0_86, %c0_87] : memref<1x42x16x128xbf16, #tpu.memory_space<vmem>>, vector<1x1x16x128xbf16>
    %253 = vector.shape_cast %252 : vector<1x1x16x128xbf16> to vector<16x128xbf16>
    %254 = arith.extf %253 : vector<16x128xbf16> to vector<16x128xf32>
    %255 = arith.index_cast %c0_i32 : i32 to index
    %c38 = arith.constant 38 : index
    %c0_88 = arith.constant 0 : index
    %c0_89 = arith.constant 0 : index
    %256 = vector.load %arg1[%255, %c38, %c0_88, %c0_89] : memref<1x42x16x128xbf16, #tpu.memory_space<vmem>>, vector<1x1x16x128xbf16>
    %257 = vector.shape_cast %256 : vector<1x1x16x128xbf16> to vector<16x128xbf16>
    %258 = arith.extf %257 : vector<16x128xbf16> to vector<16x128xf32>
    %259 = arith.index_cast %c0_i32 : i32 to index
    %c39 = arith.constant 39 : index
    %c0_90 = arith.constant 0 : index
    %c0_91 = arith.constant 0 : index
    %260 = vector.load %arg1[%259, %c39, %c0_90, %c0_91] : memref<1x42x16x128xbf16, #tpu.memory_space<vmem>>, vector<1x1x16x128xbf16>
    %261 = vector.shape_cast %260 : vector<1x1x16x128xbf16> to vector<16x128xbf16>
    %262 = arith.extf %261 : vector<16x128xbf16> to vector<16x128xf32>
    %263 = arith.index_cast %c0_i32 : i32 to index
    %c40 = arith.constant 40 : index
    %c0_92 = arith.constant 0 : index
    %c0_93 = arith.constant 0 : index
    %264 = vector.load %arg1[%263, %c40, %c0_92, %c0_93] : memref<1x42x16x128xbf16, #tpu.memory_space<vmem>>, vector<1x1x16x128xbf16>
    %265 = vector.shape_cast %264 : vector<1x1x16x128xbf16> to vector<16x128xbf16>
    %266 = arith.extf %265 : vector<16x128xbf16> to vector<16x128xf32>
    %267 = arith.index_cast %c0_i32 : i32 to index
    %c41 = arith.constant 41 : index
    %c0_94 = arith.constant 0 : index
    %c0_95 = arith.constant 0 : index
    %268 = vector.load %arg1[%267, %c41, %c0_94, %c0_95] : memref<1x42x16x128xbf16, #tpu.memory_space<vmem>>, vector<1x1x16x128xbf16>
    %269 = vector.shape_cast %268 : vector<1x1x16x128xbf16> to vector<16x128xbf16>
    %270 = arith.extf %269 : vector<16x128xbf16> to vector<16x128xf32>
    %271 = arith.mulf %234, %215 : vector<16x128xf32>
    %272 = arith.mulf %238, %220 : vector<16x128xf32>
    %273 = arith.addf %271, %272 : vector<16x128xf32>
    %274 = arith.mulf %242, %225 : vector<16x128xf32>
    %275 = arith.addf %273, %274 : vector<16x128xf32>
    %276 = arith.mulf %246, %230 : vector<16x128xf32>
    %277 = arith.addf %275, %276 : vector<16x128xf32>
    %278 = arith.mulf %250, %220 : vector<16x128xf32>
    %279 = arith.mulf %254, %225 : vector<16x128xf32>
    %280 = arith.addf %278, %279 : vector<16x128xf32>
    %281 = arith.mulf %258, %230 : vector<16x128xf32>
    %282 = arith.addf %280, %281 : vector<16x128xf32>
    %283 = arith.mulf %262, %225 : vector<16x128xf32>
    %284 = arith.mulf %266, %230 : vector<16x128xf32>
    %285 = arith.addf %283, %284 : vector<16x128xf32>
    %286 = arith.mulf %270, %230 : vector<16x128xf32>
    %287 = arith.mulf %277, %277 : vector<16x128xf32>
    %288 = arith.mulf %282, %282 : vector<16x128xf32>
    %289 = arith.addf %287, %288 : vector<16x128xf32>
    %290 = arith.mulf %285, %285 : vector<16x128xf32>
    %291 = arith.addf %289, %290 : vector<16x128xf32>
    %292 = arith.mulf %286, %286 : vector<16x128xf32>
    %293 = arith.addf %291, %292 : vector<16x128xf32>
    %294 = arith.mulf %234, %250 : vector<16x128xf32>
    %295 = arith.mulf %294, %262 : vector<16x128xf32>
    %296 = arith.mulf %295, %270 : vector<16x128xf32>
    %297 = math.absf %296 : vector<16x128xf32>
    %298 = arith.index_cast %c0_i32 : i32 to index
    %c2_96 = arith.constant 2 : index
    %c0_97 = arith.constant 0 : index
    %c0_98 = arith.constant 0 : index
    %299 = vector.load %arg2[%298, %c2_96, %c0_97, %c0_98] : memref<1x3x16x128xf32, #tpu.memory_space<vmem>>, vector<1x1x16x128xf32>
    %300 = vector.shape_cast %299 : vector<1x1x16x128xf32> to vector<16x128xf32>
    %cst_99 = arith.constant -5.000000e-01 : f32
    %301 = vector.broadcast %cst_99 : f32 to vector<16x128xf32>
    %302 = arith.mulf %301, %293 : vector<16x128xf32>
    %303 = math.exp %302 : vector<16x128xf32>
    %304 = arith.mulf %303, %297 : vector<16x128xf32>
    %305 = arith.mulf %304, %300 : vector<16x128xf32>
    %306 = arith.addf %210, %305 : vector<16x128xf32>
    %c2048_i32_100 = arith.constant 2048 : i32
    %307 = arith.muli %c0_i32, %c2048_i32_100 : i32
    %308 = arith.addi %0, %307 : i32
    %c8_i32 = arith.constant 8 : i32
    %309 = arith.subi %c8_i32, %308 : i32
    %310 = vector.broadcast %309 : i32 to vector<16x128xi32>
    %311 = arith.cmpi slt, %5, %310 : vector<16x128xi32>
    %cst_101 = arith.constant 1.000000e+00 : f32
    %312 = vector.broadcast %cst_101 : f32 to vector<16x128xf32>
    %313 = arith.select %311, %306, %312 : vector<16x128xi1>, vector<16x128xf32>
    %314 = math.log %313 : vector<16x128xf32>
    %315 = arith.addf %6, %314 : vector<16x128xf32>
    %c1_i32 = arith.constant 1 : i32
    %c0_102 = arith.constant 0 : index
    %c0_103 = arith.constant 0 : index
    %c0_104 = arith.constant 0 : index
    %316 = vector.load %arg4[%c0_102, %c0_103, %c0_104] : memref<1x16x128xf32, #tpu.memory_space<vmem>>, vector<1x16x128xf32>
    %317 = vector.shape_cast %316 : vector<1x16x128xf32> to vector<16x128xf32>
    %318 = vector.shape_cast %315 : vector<16x128xf32> to vector<1x16x128xf32>
    tpu.vector_store %arg4[%c0_102, %c0_103, %c0_104], %318 {strides = array<i32>} : memref<1x16x128xf32, #tpu.memory_space<vmem>>, vector<1x16x128xf32>,
    return
  }
  func.func @transform_0(%arg0: i32) -> (i32, i32, i32, i32) {
    %c0_i32 = arith.constant 0 : i32
    %c0_i32_0 = arith.constant 0 : i32
    %c0_i32_1 = arith.constant 0 : i32
    %c0_i32_2 = arith.constant 0 : i32
    return %arg0, %c0_i32, %c0_i32_0, %c0_i32_1 : i32, i32, i32, i32
  }
  func.func @transform_1(%arg0: i32) -> (i32, i32, i32, i32) {
    %c0_i32 = arith.constant 0 : i32
    %c0_i32_0 = arith.constant 0 : i32
    %c0_i32_1 = arith.constant 0 : i32
    %c0_i32_2 = arith.constant 0 : i32
    return %arg0, %c0_i32, %c0_i32_0, %c0_i32_1 : i32, i32, i32, i32
  }
  func.func @transform_2(%arg0: i32) -> (i32, i32, i32, i32) {
    %c0_i32 = arith.constant 0 : i32
    %c0_i32_0 = arith.constant 0 : i32
    %c0_i32_1 = arith.constant 0 : i32
    %c0_i32_2 = arith.constant 0 : i32
    return %arg0, %c0_i32, %c0_i32_0, %c0_i32_1 : i32, i32, i32, i32
  }
  func.func @transform_3(%arg0: i32) -> (i32, i32, i32) {
    %c0_i32 = arith.constant 0 : i32
    %c0_i32_0 = arith.constant 0 : i32
    %c0_i32_1 = arith.constant 0 : i32
    return %arg0, %c0_i32, %c0_i32_0 : i32, i32, i32
  }
}

</mosaic_0001>

<llo_original>
// kernel: tpu_custom_call.1
$region0: #{tpu_custom_call.1}
  #allocation0 [shape = 'u32[]', space=smem, size = 0x4, offset = 0x4, fixed_abs, tag = 'smem constant byte address 0x4 - core index']
  #allocation1 [shape = 'u32[72,128]{1,0:T(1,128)}', space=vmem, size = 0x9000, scoped, tag = 'internal scratch']
  %s0 = inlined_call_operand.hbm [shape: bf16[1,42,16,128], index: 0, kind: input, shape index: {}]
  %s1 = inlined_call_operand.hbm [shape: f32[1,3,16,128], index: 1, kind: input, shape index: {}]
  %s2 = inlined_call_operand.hbm [shape: f32[1,4,16,128], index: 2, kind: input, shape index: {}]
  %s3 = inlined_call_operand.hbm [shape: f32[1,16,128], index: 3, kind: output, shape index: {}]
  %s4 = sld [smem:[#allocation0]]
  $region34: #{tpu_custom_call.1} parent=0
    _
  %s6 = ssub.s32 1, %s4
  %s7 = scalar_select 0, %s6, %s4
  $region1: #{tpu_custom_call.1} parent=0
    #allocation2 [shape = 'u8[172032]{0}', space=vmem, size = 0x2a000, scoped, tag = 'input window, operand 0, single buffered']
    #allocation3 [shape = 's32[1]{0}', space=sflag, size = 0x4, scoped, tag = 'scoped memory for tpu_custom_call.1']
    #allocation4 [shape = 's32[1]{0}', space=sflag, size = 0x4, scoped, tag = 'scoped memory for tpu_custom_call.1']
    #allocation5 [shape = 'u8[24576]{0}', space=vmem, size = 0x6000, scoped, tag = 'input window, operand 1, single buffered']
    #allocation6 [shape = 's32[1]{0}', space=sflag, size = 0x4, scoped, tag = 'scoped memory for tpu_custom_call.1']
    #allocation7 [shape = 'u8[32768]{0}', space=vmem, size = 0x8000, scoped, tag = 'input window, operand 2, single buffered']
    #allocation8 [shape = 'u8[8192]{0}', space=vmem, size = 0x2000, scoped, tag = 'output window, operand 0, single buffered']
    %8 = vsyncpa [#allocation3], 0
    %9 = vsyncpa [#allocation6], 0
    %10 = vsyncpa [#allocation4], 0
    // Predicated region
    $region2: #{tpu_custom_call.1} parent=1 // pred_check
      _
    $region3: #{tpu_custom_call.1} parent=1 // pred_check_branch
      %12 = sbr.rel (0) target = $region5
    $region4: #{tpu_custom_call.1} parent=1 // pred_region
      %14 = vsyncadd [#allocation3], 0
      %s15 = sshll.u32 %s0, 4
      %s16 = int_to_ptr.hbm [resolvable:$true] %s15
      %s17 = sshll.u32 [#allocation2], 4
      %s18 = int_to_ptr.vmem [resolvable:$true] %s17
      %23 = dma.hbm_to_vmem [thread:$0]  %s16, 5376, %s18, [#allocation3], 64, 64, 4
    $region5: #{tpu_custom_call.1} parent=1 // pred_fallthru
      _
    // Predicated region
    $region6: #{tpu_custom_call.1} parent=1 // pred_check
      _
    $region7: #{tpu_custom_call.1} parent=1 // pred_check_branch
      %25 = sbr.rel (0) target = $region9
    $region8: #{tpu_custom_call.1} parent=1 // pred_region
      %27 = vsyncadd [#allocation6], 0
      %s28 = sshll.u32 %s1, 4
      %s29 = int_to_ptr.hbm [resolvable:$true] %s28
      %s30 = sshll.u32 [#allocation5], 4
      %s31 = int_to_ptr.vmem [resolvable:$true] %s30
      %36 = dma.hbm_to_vmem [thread:$0]  %s29, 768, %s31, [#allocation6], 128, 128, 8
    $region9: #{tpu_custom_call.1} parent=1 // pred_fallthru
      _
    // Predicated region
    $region10: #{tpu_custom_call.1} parent=1 // pred_check
      _
    $region11: #{tpu_custom_call.1} parent=1 // pred_check_branch
      %38 = sbr.rel (0) target = $region13
    $region12: #{tpu_custom_call.1} parent=1 // pred_region
      %40 = vsyncadd [#allocation6], 0
      %s41 = sshll.u32 %s2, 4
      %s42 = int_to_ptr.hbm [resolvable:$true] %s41
      %s43 = sshll.u32 [#allocation7], 4
      %s44 = int_to_ptr.vmem [resolvable:$true] %s43
      %49 = dma.hbm_to_vmem [thread:$0]  %s42, 1024, %s44, [#allocation6], 128, 128, 8
    $region13: #{tpu_custom_call.1} parent=1 // pred_fallthru
      _
    // Predicated region
    $region14: #{tpu_custom_call.1} parent=1 // pred_check
      _
    $region15: #{tpu_custom_call.1} parent=1 // pred_check_branch
      %51 = sbr.rel (0) target = $region17
    $region16: #{tpu_custom_call.1} parent=1 // pred_region
      %53 = dma.done [#allocation3], 5376
    $region17: #{tpu_custom_call.1} parent=1 // pred_fallthru
      _
    // Predicated region
    $region18: #{tpu_custom_call.1} parent=1 // pred_check
      _
    $region19: #{tpu_custom_call.1} parent=1 // pred_check_branch
      %55 = sbr.rel (0) target = $region21
    $region20: #{tpu_custom_call.1} parent=1 // pred_region
      %57 = dma.done [#allocation6], 768
    $region21: #{tpu_custom_call.1} parent=1 // pred_fallthru
      _
    // Predicated region
    $region22: #{tpu_custom_call.1} parent=1 // pred_check
      _
    $region23: #{tpu_custom_call.1} parent=1 // pred_check_branch
      %59 = sbr.rel (0) target = $region25
    $region24: #{tpu_custom_call.1} parent=1 // pred_region
      %61 = dma.done [#allocation6], 1024
    $region25: #{tpu_custom_call.1} parent=1 // pred_fallthru
      _
    %s62 = smul.u32 0, 2048
    %v63 = vlaneseq
    %v64 = vshrl.u32 %v63, 7
    %v65 = vadd.s32 %v64, 8
    %v66 = vlaneseq
    %v67 = vand.u32 %v66, 127
    %v68 = vmul.u32 %v64, 128
    %v69 = vmul.u32 %v65, 128
    %v70 = vadd.s32 %v68, %v67
    %v71 = vadd.s32 %v69, %v67
    %v72 = vld [vmem:[#allocation7] sm:$0xff]
    %v73 = vld [vmem:[#allocation7 + $0x8] sm:$0xff]
    %v74 = vld [vmem:[#allocation7 + $0x10] sm:$0xff]
    %v75 = vld [vmem:[#allocation7 + $0x18] sm:$0xff]
    %v76 = vld [vmem:[#allocation7 + $0x20] sm:$0xff]
    %v77 = vld [vmem:[#allocation7 + $0x28] sm:$0xff]
    %v78 = vld [vmem:[#allocation7 + $0x30] sm:$0xff]
    %v79 = vld [vmem:[#allocation7 + $0x38] sm:$0xff]
    %v80 = vld [vmem:[#allocation2] sm:$0xf]
    %v81 = vld [vmem:[#allocation2 + $0x4] sm:$0xf]
    %v82 = vunpack.c.l.bf16 %v80
    %v83 = vunpack.c.l.bf16 %v81
    %v84 = vsub.f32 %v72, %v82
    %v85 = vsub.f32 %v73, %v83
    %s86 = scalar_lea.vmem [#allocation2], 8
    %v87 = vld [vmem:[%s86] sm:$0xf]
    %v88 = vld [vmem:[%s86 + $0x4] sm:$0xf]
    %v89 = vunpack.c.l.bf16 %v87
    %v90 = vunpack.c.l.bf16 %v88
    %v91 = vsub.f32 %v74, %v89
    %v92 = vsub.f32 %v75, %v90
    %s93 = scalar_lea.vmem [#allocation2], 16
    %v94 = vld [vmem:[%s93] sm:$0xf]
    %v95 = vld [vmem:[%s93 + $0x4] sm:$0xf]
    %v96 = vunpack.c.l.bf16 %v94
    %v97 = vunpack.c.l.bf16 %v95
    %v98 = vsub.f32 %v76, %v96
    %v99 = vsub.f32 %v77, %v97
    %s100 = scalar_lea.vmem [#allocation2], 24
    %v101 = vld [vmem:[%s100] sm:$0xf]
    %v102 = vld [vmem:[%s100 + $0x4] sm:$0xf]
    %v103 = vunpack.c.l.bf16 %v101
    %v104 = vunpack.c.l.bf16 %v102
    %v105 = vsub.f32 %v78, %v103
    %v106 = vsub.f32 %v79, %v104
    %s107 = scalar_lea.vmem [#allocation2], 32
    %v108 = vld [vmem:[%s107] sm:$0xf]
    %v109 = vld [vmem:[%s107 + $0x4] sm:$0xf]
    %v110 = vunpack.c.l.bf16 %v108
    %v111 = vunpack.c.l.bf16 %v109
    %s112 = scalar_lea.vmem [#allocation2], 40
    %v113 = vld [vmem:[%s112] sm:$0xf]
    %v114 = vld [vmem:[%s112 + $0x4] sm:$0xf]
    %v115 = vunpack.c.l.bf16 %v113
    %v116 = vunpack.c.l.bf16 %v114
    %s117 = scalar_lea.vmem [#allocation2], 48
    %v118 = vld [vmem:[%s117] sm:$0xf]
    %v119 = vld [vmem:[%s117 + $0x4] sm:$0xf]
    %v120 = vunpack.c.l.bf16 %v118
    %v121 = vunpack.c.l.bf16 %v119
    %s122 = scalar_lea.vmem [#allocation2], 56
    %v123 = vld [vmem:[%s122] sm:$0xf]
    %v124 = vld [vmem:[%s122 + $0x4] sm:$0xf]
    %v125 = vunpack.c.l.bf16 %v123
    %v126 = vunpack.c.l.bf16 %v124
    %s127 = scalar_lea.vmem [#allocation2], 64
    %v128 = vld [vmem:[%s127] sm:$0xf]
    %v129 = vld [vmem:[%s127 + $0x4] sm:$0xf]
    %v130 = vunpack.c.l.bf16 %v128
    %v131 = vunpack.c.l.bf16 %v129
    %s132 = scalar_lea.vmem [#allocation2], 72
    %v133 = vld [vmem:[%s132] sm:$0xf]
    %v134 = vld [vmem:[%s132 + $0x4] sm:$0xf]
    %v135 = vunpack.c.l.bf16 %v133
    %v136 = vunpack.c.l.bf16 %v134
    %s137 = scalar_lea.vmem [#allocation2], 80
    %v138 = vld [vmem:[%s137] sm:$0xf]
    %v139 = vld [vmem:[%s137 + $0x4] sm:$0xf]
    %v140 = vunpack.c.l.bf16 %v138
    %v141 = vunpack.c.l.bf16 %v139
    %s142 = scalar_lea.vmem [#allocation2], 88
    %v143 = vld [vmem:[%s142] sm:$0xf]
    %v144 = vld [vmem:[%s142 + $0x4] sm:$0xf]
    %v145 = vunpack.c.l.bf16 %v143
    %v146 = vunpack.c.l.bf16 %v144
    %s147 = scalar_lea.vmem [#allocation2], 96
    %v148 = vld [vmem:[%s147] sm:$0xf]
    %v149 = vld [vmem:[%s147 + $0x4] sm:$0xf]
    %v150 = vunpack.c.l.bf16 %v148
    %v151 = vunpack.c.l.bf16 %v149
    %s152 = scalar_lea.vmem [#allocation2], 104
    %v153 = vld [vmem:[%s152] sm:$0xf]
    %v154 = vld [vmem:[%s152 + $0x4] sm:$0xf]
    %v155 = vunpack.c.l.bf16 %v153
    %v156 = vunpack.c.l.bf16 %v154
    %v157 = vmul.f32 %v110, %v84
    %v158 = vmul.f32 %v111, %v85
    %v159 = vmul.f32 %v115, %v91
    %v160 = vmul.f32 %v116, %v92
    %v161 = vadd.f32 %v157, %v159
    %v162 = vadd.f32 %v158, %v160
    %v163 = vmul.f32 %v120, %v98
    %v164 = vmul.f32 %v121, %v99
    %v165 = vadd.f32 %v161, %v163
    %v166 = vadd.f32 %v162, %v164
    %v167 = vmul.f32 %v125, %v105
    %v168 = vmul.f32 %v126, %v106
    %v169 = vadd.f32 %v165, %v167
    %v170 = vadd.f32 %v166, %v168
    %v171 = vmul.f32 %v130, %v91
    %v172 = vmul.f32 %v131, %v92
    %v173 = vmul.f32 %v135, %v98
    %v174 = vmul.f32 %v136, %v99
    %v175 = vadd.f32 %v171, %v173
    %v176 = vadd.f32 %v172, %v174
    %v177 = vmul.f32 %v140, %v105
    %v178 = vmul.f32 %v141, %v106
    %v179 = vadd.f32 %v175, %v177
    %v180 = vadd.f32 %v176, %v178
    %v181 = vmul.f32 %v145, %v98
    %v182 = vmul.f32 %v146, %v99
    %v183 = vmul.f32 %v150, %v105
    %v184 = vmul.f32 %v151, %v106
    %v185 = vadd.f32 %v181, %v183
    %v186 = vadd.f32 %v182, %v184
    %v187 = vmul.f32 %v155, %v105
    %v188 = vmul.f32 %v156, %v106
    %v189 = vmul.f32 %v169, %v169
    %v190 = vmul.f32 %v170, %v170
    %v191 = vmul.f32 %v179, %v179
    %v192 = vmul.f32 %v180, %v180
    %v193 = vadd.f32 %v189, %v191
    %v194 = vadd.f32 %v190, %v192
    %v195 = vmul.f32 %v185, %v185
    %v196 = vmul.f32 %v186, %v186
    %v197 = vadd.f32 %v193, %v195
    %v198 = vadd.f32 %v194, %v196
    %v199 = vmul.f32 %v187, %v187
    %v200 = vmul.f32 %v188, %v188
    %v201 = vadd.f32 %v197, %v199
    %v202 = vadd.f32 %v198, %v200
    %v203 = vmul.f32 %v110, %v130
    %v204 = vmul.f32 %v111, %v131
    %v205 = vmul.f32 %v203, %v145
    %v206 = vmul.f32 %v204, %v146
    %v207 = vmul.f32 %v205, %v155
    %v208 = vmul.f32 %v206, %v156
    %v209 = vand.u32 2147483647, %v207
    %v210 = vand.u32 2147483647, %v208
    %v211 = vld [vmem:[#allocation5] sm:$0xff]
    %v212 = vld [vmem:[#allocation5 + $0x8] sm:$0xff]
    %v213 = vmul.f32 %v201, -0.5
    %v214 = vmul.f32 %v202, -0.5
    %v215 = vmul.f32 %v213, 1.442695
    %v216 = vpow.pop %v215
    %v217 = vmul.f32 %v214, 1.442695
    %v218 = vpow.pop %v217
    %v219 = vmul.f32 %v216, %v209
    %v220 = vmul.f32 %v218, %v210
    %v221 = vmul.f32 %v219, %v211
    %v222 = vmul.f32 %v220, %v212
    %v223 = vadd.f32 %v221, 0.0
    %v224 = vadd.f32 %v222, 0.0
    %s225 = scalar_lea.vmem [#allocation2], 112
    %v226 = vld [vmem:[%s225] sm:$0xf]
    %v227 = vld [vmem:[%s225 + $0x4] sm:$0xf]
    %v228 = vunpack.c.l.bf16 %v226
    %v229 = vunpack.c.l.bf16 %v227
    %v230 = vsub.f32 %v72, %v228
    %v231 = vsub.f32 %v73, %v229
    %s232 = scalar_lea.vmem [#allocation2], 120
    %v233 = vld [vmem:[%s232] sm:$0xf]
    %v234 = vld [vmem:[%s232 + $0x4] sm:$0xf]
    %v235 = vunpack.c.l.bf16 %v233
    %v236 = vunpack.c.l.bf16 %v234
    %v237 = vsub.f32 %v74, %v235
    %v238 = vsub.f32 %v75, %v236
    %s239 = scalar_lea.vmem [#allocation2], 128
    %v240 = vld [vmem:[%s239] sm:$0xf]
    %v241 = vld [vmem:[%s239 + $0x4] sm:$0xf]
    %v242 = vunpack.c.l.bf16 %v240
    %v243 = vunpack.c.l.bf16 %v241
    %v244 = vsub.f32 %v76, %v242
    %v245 = vsub.f32 %v77, %v243
    %s246 = scalar_lea.vmem [#allocation2], 136
    %v247 = vld [vmem:[%s246] sm:$0xf]
    %v248 = vld [vmem:[%s246 + $0x4] sm:$0xf]
    %v249 = vunpack.c.l.bf16 %v247
    %v250 = vunpack.c.l.bf16 %v248
    %v251 = vsub.f32 %v78, %v249
    %v252 = vsub.f32 %v79, %v250
    %s253 = scalar_lea.vmem [#allocation2], 144
    %v254 = vld [vmem:[%s253] sm:$0xf]
    %v255 = vld [vmem:[%s253 + $0x4] sm:$0xf]
    %v256 = vunpack.c.l.bf16 %v254
    %v257 = vunpack.c.l.bf16 %v255
    %s258 = scalar_lea.vmem [#allocation2], 152
    %v259 = vld [vmem:[%s258] sm:$0xf]
    %v260 = vld [vmem:[%s258 + $0x4] sm:$0xf]
    %v261 = vunpack.c.l.bf16 %v259
    %v262 = vunpack.c.l.bf16 %v260
    %s263 = scalar_lea.vmem [#allocation2], 160
    %v264 = vld [vmem:[%s263] sm:$0xf]
    %v265 = vld [vmem:[%s263 + $0x4] sm:$0xf]
    %v266 = vunpack.c.l.bf16 %v264
    %v267 = vunpack.c.l.bf16 %v265
    %s268 = scalar_lea.vmem [#allocation2], 168
    %v269 = vld [vmem:[%s268] sm:$0xf]
    %v270 = vld [vmem:[%s268 + $0x4] sm:$0xf]
    %v271 = vunpack.c.l.bf16 %v269
    %v272 = vunpack.c.l.bf16 %v270
    %s273 = scalar_lea.vmem [#allocation2], 176
    %v274 = vld [vmem:[%s273] sm:$0xf]
    %v275 = vld [vmem:[%s273 + $0x4] sm:$0xf]
    %v276 = vunpack.c.l.bf16 %v274
    %v277 = vunpack.c.l.bf16 %v275
    %s278 = scalar_lea.vmem [#allocation2], 184
    %v279 = vld [vmem:[%s278] sm:$0xf]
    %v280 = vld [vmem:[%s278 + $0x4] sm:$0xf]
    %v281 = vunpack.c.l.bf16 %v279
    %v282 = vunpack.c.l.bf16 %v280
    %s283 = scalar_lea.vmem [#allocation2], 192
    %v284 = vld [vmem:[%s283] sm:$0xf]
    %v285 = vld [vmem:[%s283 + $0x4] sm:$0xf]
    %v286 = vunpack.c.l.bf16 %v284
    %v287 = vunpack.c.l.bf16 %v285
    %s288 = scalar_lea.vmem [#allocation2], 200
    %v289 = vld [vmem:[%s288] sm:$0xf]
    %v290 = vld [vmem:[%s288 + $0x4] sm:$0xf]
    %v291 = vunpack.c.l.bf16 %v289
    %v292 = vunpack.c.l.bf16 %v290
    %s293 = scalar_lea.vmem [#allocation2], 208
    %v294 = vld [vmem:[%s293] sm:$0xf]
    %v295 = vld [vmem:[%s293 + $0x4] sm:$0xf]
    %v296 = vunpack.c.l.bf16 %v294
    %v297 = vunpack.c.l.bf16 %v295
    %s298 = scalar_lea.vmem [#allocation2], 216
    %v299 = vld [vmem:[%s298] sm:$0xf]
    %v300 = vld [vmem:[%s298 + $0x4] sm:$0xf]
    %v301 = vunpack.c.l.bf16 %v299
    %v302 = vunpack.c.l.bf16 %v300
    %v303 = vmul.f32 %v256, %v230
    %v304 = vmul.f32 %v257, %v231
    %v305 = vmul.f32 %v261, %v237
    %v306 = vmul.f32 %v262, %v238
    %v307 = vadd.f32 %v303, %v305
    %v308 = vadd.f32 %v304, %v306
    %v309 = vmul.f32 %v266, %v244
    %v310 = vmul.f32 %v267, %v245
    %v311 = vadd.f32 %v307, %v309
    %v312 = vadd.f32 %v308, %v310
    %v313 = vmul.f32 %v271, %v251
    %v314 = vmul.f32 %v272, %v252
    %v315 = vadd.f32 %v311, %v313
    %v316 = vadd.f32 %v312, %v314
    %v317 = vmul.f32 %v276, %v237
    %v318 = vmul.f32 %v277, %v238
    %v319 = vmul.f32 %v281, %v244
    %v320 = vmul.f32 %v282, %v245
    %v321 = vadd.f32 %v317, %v319
    %v322 = vadd.f32 %v318, %v320
    %v323 = vmul.f32 %v286, %v251
    %v324 = vmul.f32 %v287, %v252
    %v325 = vadd.f32 %v321, %v323
    %v326 = vadd.f32 %v322, %v324
    %v327 = vmul.f32 %v291, %v244
    %v328 = vmul.f32 %v292, %v245
    %v329 = vmul.f32 %v296, %v251
    %v330 = vmul.f32 %v297, %v252
    %v331 = vadd.f32 %v327, %v329
    %v332 = vadd.f32 %v328, %v330
    %v333 = vmul.f32 %v301, %v251
    %v334 = vmul.f32 %v302, %v252
    %v335 = vmul.f32 %v315, %v315
    %v336 = vmul.f32 %v316, %v316
    %v337 = vmul.f32 %v325, %v325
    %v338 = vmul.f32 %v326, %v326
    %v339 = vadd.f32 %v335, %v337
    %v340 = vadd.f32 %v336, %v338
    %v341 = vmul.f32 %v331, %v331
    %v342 = vmul.f32 %v332, %v332
    %v343 = vadd.f32 %v339, %v341
    %v344 = vadd.f32 %v340, %v342
    %v345 = vmul.f32 %v333, %v333
    %v346 = vmul.f32 %v334, %v334
    %v347 = vadd.f32 %v343, %v345
    %v348 = vadd.f32 %v344, %v346
    %v349 = vmul.f32 %v256, %v276
    %v350 = vmul.f32 %v257, %v277
    %v351 = vmul.f32 %v349, %v291
    %v352 = vmul.f32 %v350, %v292
    %v353 = vmul.f32 %v351, %v301
    %v354 = vmul.f32 %v352, %v302
    %v355 = vand.u32 2147483647, %v353
    %v356 = vand.u32 2147483647, %v354
    %s357 = scalar_lea.vmem [#allocation5], 16
    %v358 = vld [vmem:[%s357] sm:$0xff]
    %v359 = vld [vmem:[%s357 + $0x8] sm:$0xff]
    %v360 = vmul.f32 %v347, -0.5
    %v361 = vmul.f32 %v348, -0.5
    %v362 = vmul.f32 %v360, 1.442695
    %v363 = vpow.pop %v362
    %v364 = vmul.f32 %v361, 1.442695
    %v365 = vpow.pop %v364
    %v366 = vmul.f32 %v363, %v355
    %v367 = vmul.f32 %v365, %v356
    %v368 = vmul.f32 %v366, %v358
    %v369 = vmul.f32 %v367, %v359
    %v370 = vadd.f32 %v223, %v368
    %v371 = vadd.f32 %v224, %v369
    %s372 = scalar_lea.vmem [#allocation2], 224
    %v373 = vld [vmem:[%s372] sm:$0xf]
    %v374 = vld [vmem:[%s372 + $0x4] sm:$0xf]
    %v375 = vunpack.c.l.bf16 %v373
    %v376 = vunpack.c.l.bf16 %v374
    %v377 = vsub.f32 %v72, %v375
    %v378 = vsub.f32 %v73, %v376
    %s379 = scalar_lea.vmem [#allocation2], 232
    %v380 = vld [vmem:[%s379] sm:$0xf]
    %v381 = vld [vmem:[%s379 + $0x4] sm:$0xf]
    %v382 = vunpack.c.l.bf16 %v380
    %v383 = vunpack.c.l.bf16 %v381
    %v384 = vsub.f32 %v74, %v382
    %v385 = vsub.f32 %v75, %v383
    %s386 = scalar_lea.vmem [#allocation2], 240
    %v387 = vld [vmem:[%s386] sm:$0xf]
    %v388 = vld [vmem:[%s386 + $0x4] sm:$0xf]
    %v389 = vunpack.c.l.bf16 %v387
    %v390 = vunpack.c.l.bf16 %v388
    %v391 = vsub.f32 %v76, %v389
    %v392 = vsub.f32 %v77, %v390
    %s393 = scalar_lea.vmem [#allocation2], 248
    %v394 = vld [vmem:[%s393] sm:$0xf]
    %v395 = vld [vmem:[%s393 + $0x4] sm:$0xf]
    %v396 = vunpack.c.l.bf16 %v394
    %v397 = vunpack.c.l.bf16 %v395
    %v398 = vsub.f32 %v78, %v396
    %v399 = vsub.f32 %v79, %v397
    %s400 = scalar_lea.vmem [#allocation2], 256
    %v401 = vld [vmem:[%s400] sm:$0xf]
    %v402 = vld [vmem:[%s400 + $0x4] sm:$0xf]
    %v403 = vunpack.c.l.bf16 %v401
    %v404 = vunpack.c.l.bf16 %v402
    %s405 = scalar_lea.vmem [#allocation2], 264
    %v406 = vld [vmem:[%s405] sm:$0xf]
    %v407 = vld [vmem:[%s405 + $0x4] sm:$0xf]
    %v408 = vunpack.c.l.bf16 %v406
    %v409 = vunpack.c.l.bf16 %v407
    %s410 = scalar_lea.vmem [#allocation2], 272
    %v411 = vld [vmem:[%s410] sm:$0xf]
    %v412 = vld [vmem:[%s410 + $0x4] sm:$0xf]
    %v413 = vunpack.c.l.bf16 %v411
    %v414 = vunpack.c.l.bf16 %v412
    %s415 = scalar_lea.vmem [#allocation2], 280
    %v416 = vld [vmem:[%s415] sm:$0xf]
    %v417 = vld [vmem:[%s415 + $0x4] sm:$0xf]
    %v418 = vunpack.c.l.bf16 %v416
    %v419 = vunpack.c.l.bf16 %v417
    %s420 = scalar_lea.vmem [#allocation2], 288
    %v421 = vld [vmem:[%s420] sm:$0xf]
    %v422 = vld [vmem:[%s420 + $0x4] sm:$0xf]
    %v423 = vunpack.c.l.bf16 %v421
    %v424 = vunpack.c.l.bf16 %v422
    %s425 = scalar_lea.vmem [#allocation2], 296
    %v426 = vld [vmem:[%s425] sm:$0xf]
    %v427 = vld [vmem:[%s425 + $0x4] sm:$0xf]
    %v428 = vunpack.c.l.bf16 %v426
    %v429 = vunpack.c.l.bf16 %v427
    %s430 = scalar_lea.vmem [#allocation2], 304
    %v431 = vld [vmem:[%s430] sm:$0xf]
    %v432 = vld [vmem:[%s430 + $0x4] sm:$0xf]
    %v433 = vunpack.c.l.bf16 %v431
    %v434 = vunpack.c.l.bf16 %v432
    %s435 = scalar_lea.vmem [#allocation2], 312
    %v436 = vld [vmem:[%s435] sm:$0xf]
    %v437 = vld [vmem:[%s435 + $0x4] sm:$0xf]
    %v438 = vunpack.c.l.bf16 %v436
    %v439 = vunpack.c.l.bf16 %v437
    %s440 = scalar_lea.vmem [#allocation2], 320
    %v441 = vld [vmem:[%s440] sm:$0xf]
    %v442 = vld [vmem:[%s440 + $0x4] sm:$0xf]
    %v443 = vunpack.c.l.bf16 %v441
    %v444 = vunpack.c.l.bf16 %v442
    %s445 = scalar_lea.vmem [#allocation2], 328
    %v446 = vld [vmem:[%s445] sm:$0xf]
    %v447 = vld [vmem:[%s445 + $0x4] sm:$0xf]
    %v448 = vunpack.c.l.bf16 %v446
    %v449 = vunpack.c.l.bf16 %v447
    %v450 = vmul.f32 %v403, %v377
    %v451 = vmul.f32 %v404, %v378
    %v452 = vmul.f32 %v408, %v384
    %v453 = vmul.f32 %v409, %v385
    %v454 = vadd.f32 %v450, %v452
    %v455 = vadd.f32 %v451, %v453
    %v456 = vmul.f32 %v413, %v391
    %v457 = vmul.f32 %v414, %v392
    %v458 = vadd.f32 %v454, %v456
    %v459 = vadd.f32 %v455, %v457
    %v460 = vmul.f32 %v418, %v398
    %v461 = vmul.f32 %v419, %v399
    %v462 = vadd.f32 %v458, %v460
    %v463 = vadd.f32 %v459, %v461
    %v464 = vmul.f32 %v423, %v384
    %v465 = vmul.f32 %v424, %v385
    %v466 = vmul.f32 %v428, %v391
    %v467 = vmul.f32 %v429, %v392
    %v468 = vadd.f32 %v464, %v466
    %v469 = vadd.f32 %v465, %v467
    %v470 = vmul.f32 %v433, %v398
    %v471 = vmul.f32 %v434, %v399
    %v472 = vadd.f32 %v468, %v470
    %v473 = vadd.f32 %v469, %v471
    %v474 = vmul.f32 %v438, %v391
    %v475 = vmul.f32 %v439, %v392
    %v476 = vmul.f32 %v443, %v398
    %v477 = vmul.f32 %v444, %v399
    %v478 = vadd.f32 %v474, %v476
    %v479 = vadd.f32 %v475, %v477
    %v480 = vmul.f32 %v448, %v398
    %v481 = vmul.f32 %v449, %v399
    %v482 = vmul.f32 %v462, %v462
    %v483 = vmul.f32 %v463, %v463
    %v484 = vmul.f32 %v472, %v472
    %v485 = vmul.f32 %v473, %v473
    %v486 = vadd.f32 %v482, %v484
    %v487 = vadd.f32 %v483, %v485
    %v488 = vmul.f32 %v478, %v478
    %v489 = vmul.f32 %v479, %v479
    %v490 = vadd.f32 %v486, %v488
    %v491 = vadd.f32 %v487, %v489
    %v492 = vmul.f32 %v480, %v480
    %v493 = vmul.f32 %v481, %v481
    %v494 = vadd.f32 %v490, %v492
    %v495 = vadd.f32 %v491, %v493
    %v496 = vmul.f32 %v403, %v423
    %v497 = vmul.f32 %v404, %v424
    %v498 = vmul.f32 %v496, %v438
    %v499 = vmul.f32 %v497, %v439
    %v500 = vmul.f32 %v498, %v448
    %v501 = vmul.f32 %v499, %v449
    %v502 = vand.u32 2147483647, %v500
    %v503 = vand.u32 2147483647, %v501
    %s504 = scalar_lea.vmem [#allocation5], 32
    %v505 = vld [vmem:[%s504] sm:$0xff]
    %v506 = vld [vmem:[%s504 + $0x8] sm:$0xff]
    %v507 = vmul.f32 %v494, -0.5
    %v508 = vmul.f32 %v495, -0.5
    %v509 = vmul.f32 %v507, 1.442695
    %v510 = vpow.pop %v509
    %v511 = vmul.f32 %v508, 1.442695
    %v512 = vpow.pop %v511
    %v513 = vmul.f32 %v510, %v502
    %v514 = vmul.f32 %v512, %v503
    %v515 = vmul.f32 %v513, %v505
    %v516 = vmul.f32 %v514, %v506
    %v517 = vadd.f32 %v370, %v515
    %v518 = vadd.f32 %v371, %v516
    %s519 = ssub.s32 8, %s62
    %v520 = vstv %s519
    %vm521 = vcmp.lt.s32.totalorder %v70, %v520
    %vm522 = vcmp.lt.s32.totalorder %v71, %v520
    %v523 = vsel %vm521, %v517, 1.0
    %v524 = vsel %vm522, %v518, 1.0
    %v525 = vlog2.pop %v523
    %v526 = vmul.f32 %v525, 0.6931472
    %v527 = vlog2.pop %v524
    %v528 = vmul.f32 %v527, 0.6931472
    %v529 = vadd.f32 %v526, 0.0
    %v530 = vadd.f32 %v528, 0.0
    %531 = vst [vmem:[#allocation8] sm:$0xff] %v529
    %532 = vst [vmem:[#allocation8 + $0x8] sm:$0xff] %v530
    // Predicated region
    $region26: #{tpu_custom_call.1} parent=1 // pred_check
      _
    $region27: #{tpu_custom_call.1} parent=1 // pred_check_branch
      %534 = sbr.rel (0) target = $region29
    $region28: #{tpu_custom_call.1} parent=1 // pred_region
      %536 = vsyncadd [#allocation4], 0
      %s537 = sshll.u32 [#allocation8], 4
      %s538 = int_to_ptr.vmem [resolvable:$true] %s537
      %s539 = sshll.u32 %s3, 4
      %s540 = int_to_ptr.hbm [resolvable:$true] %s539
      %545 = dma.vmem_to_hbm [thread:$0]  %s538, 256, %s540, [#allocation4], 128, 128, 8
    $region29: #{tpu_custom_call.1} parent=1 // pred_fallthru
      _
    // Predicated region
    $region30: #{tpu_custom_call.1} parent=1 // pred_check
      _
    $region31: #{tpu_custom_call.1} parent=1 // pred_check_branch
      %547 = sbr.rel (0) target = $region33
    $region32: #{tpu_custom_call.1} parent=1 // pred_region
      %549 = dma.done [#allocation4], 256
    $region33: #{tpu_custom_call.1} parent=1 // pred_fallthru
      _
    %550 = vsyncpa [#allocation3], 1
    %551 = vsyncpa [#allocation6], 1
    %552 = vsyncpa [#allocation4], 1

</llo_original>
